<compile_context>
chip_gen: v7x
topology: tpu7x:2x2x1
jax: 0.10.0
libtpu: 0.0.40
codegen_flags: <defaults>
</compile_context>

<pallas_src>
import functools

import jax
import jax.numpy as jnp
from jax import lax
from jax.experimental import pallas as pl
from jax.experimental.pallas import tpu as pltpu

LAMBDA_REG = 0.5
LN_EPS = 1e-5  # torch.nn.LayerNorm default eps


def _round_up(a, b):
    return ((a + b - 1) // b) * b


def _gate_child_head_kernel(
    x_ref, pp_ref, y_ref, thr_ref,
    ln_g_ref, ln_b_ref, gw_ref, gb_ref, fwt_ref, fb_ref, cw_ref,
    probs_ref, part_ref,
    *, n_valid, needs_mask):
    tile_b = x_ref.shape[0]
    C = fwt_ref.shape[0]
    P = gw_ref.shape[0]

    x = x_ref[...]            # (tile_b, H) f32 CLS rows (DMA'd directly from x)
    pp = pp_ref[...]          # (tile_b, P)

    # --- LayerNorm over hidden dim -------------------------------------------
    mu = jnp.mean(x, axis=-1, keepdims=True)
    var = jnp.mean((x - mu) ** 2, axis=-1, keepdims=True)
    xn = (x - mu) * lax.rsqrt(var + LN_EPS)
    xn = xn * ln_g_ref[...] + ln_b_ref[...]

    # --- gate = sigmoid(parent_prob @ Wg + bg), done on the VPU ---------------
    # K = parent_classes is tiny (usually 1); pushing that outer product through
    # the MXU wastes a vmatmul push/pop, so use broadcast multiply-adds instead.
    gate_pre = pp[:, 0:1] * gw_ref[0:1, :] + gb_ref[...]
    for p in range(1, P):
        gate_pre = gate_pre + pp[:, p:p + 1] * gw_ref[p:p + 1, :]
    h = xn * jax.nn.sigmoid(gate_pre)                      # (tile_b, H)

    # --- final linear head ----------------------------------------------------
    cls_ids = lax.broadcasted_iota(jnp.int32, (tile_b, C), 1)
    if C <= 16:
        # For tiny C the MXU would be <2% utilized; do f32 VPU mul + lane reduce.
        logits = jnp.zeros((tile_b, C), jnp.float32) + fb_ref[...]
        for c in range(C):
            col = jnp.sum(h * fwt_ref[c:c + 1, :], axis=-1, keepdims=True)
            logits = logits + jnp.where(cls_ids == c, col, 0.0)
    else:
        logits = lax.dot_general(h, fwt_ref[...], (((1,), (1,)), ((), ())),
                                 preferred_element_type=jnp.float32) + fb_ref[...]

    # --- softmax: the module returns these probabilities ----------------------
    m = jnp.max(logits, axis=-1, keepdims=True)
    e = jnp.exp(logits - m)
    # NOTE: pl.reciprocal(..., approx=True) would move this divide to the EUP
    # slot; kept exact so the returned probabilities hold tight tolerances.
    probs = e / jnp.sum(e, axis=-1, keepdims=True)
    probs_ref[...] = probs

    # --- per-tile partial loss (finalized in the wrapper) ----------------------
    # Weighted CE with `probs` treated as logits (mirrors the torch module, which
    # feeds softmax output into F.cross_entropy).
    row_max = jnp.max(probs, axis=-1, keepdims=True)       # reused for argmax
    lse = jnp.log(jnp.sum(jnp.exp(probs - row_max), axis=-1, keepdims=True)) + row_max
    log_sm = probs - lse
    onehot = (cls_ids == y_ref[...]).astype(jnp.float32)
    picked_logp = jnp.sum(log_sm * onehot, axis=-1, keepdims=True)
    picked_w = jnp.sum(cw_ref[...] * onehot, axis=-1, keepdims=True)
    per_sample = -picked_w * picked_logp                   # (tile_b, 1)

    # Conflict: parent class-0 prob >= threshold AND argmax(child) == 0.
    # argmax(softmax(probs)) == argmax(probs) (softmax is monotone), so no third
    # softmax is needed and row_max is reused.
    thr = thr_ref[0, 0]
    conflict = jnp.logical_and(pp[:, 0:1] >= thr, probs[:, 0:1] >= row_max)
    conf = conflict.astype(jnp.float32)

    if needs_mask:  # zero out padded tail rows of the last batch tile
        row = (lax.broadcasted_iota(jnp.int32, (tile_b, 1), 0)
               + pl.program_id(0) * tile_b)
        valid = row < n_valid
        per_sample = jnp.where(valid, per_sample, 0.0)
        conf = jnp.where(valid, conf, 0.0)

    ce_sum = jnp.sum(per_sample, axis=0, keepdims=True)    # (1, 1)
    conf_sum = jnp.sum(conf, axis=0, keepdims=True)        # (1, 1)
    lane = lax.broadcasted_iota(jnp.int32, part_ref.shape, 2)
    part_ref[...] = jnp.where(lane == 0, ce_sum,
                              jnp.where(lane == 1, conf_sum, 0.0))


def init_params(key, parent_classes, child_classes, hidden_dim):
    k1, k2, k3 = jax.random.split(key, 3)
    return dict(
        ln_g=jnp.ones((1, hidden_dim), jnp.float32),
        ln_b=jnp.zeros((1, hidden_dim), jnp.float32),
        gate_w=0.1 * jax.random.normal(k1, (parent_classes, hidden_dim),
                                       jnp.float32),
        gate_b=jnp.zeros((1, hidden_dim), jnp.float32),
        fc_w=0.1 * jax.random.normal(k2, (hidden_dim, child_classes),
                                     jnp.float32),
        fc_b=0.02 * jax.random.normal(k3, (1, child_classes), jnp.float32),
        cls_w=jnp.array([[1.0, 5.0, 15.0]], jnp.float32),  # self.weights
    )


def gate_child_head_forward(x, y, parent_prob, threshold, params, *, tile_b=512):
    """Returns (softmax probabilities (B, C), scalar total loss)."""
    x = jnp.asarray(x, jnp.float32)
    B, S, H = x.shape
    P = params["gate_w"].shape[0]
    C = params["fc_w"].shape[1]

    tile_b = max(8, min(_round_up(tile_b, 8), _round_up(B, 8)))
    B_pad = _round_up(B, tile_b)
    n_tiles = B_pad // tile_b

    # CLS rows are DMA'd straight out of the full x: reshape (B,S,H)->(B,S*H)
    # (free for a contiguous array) and let the BlockSpec read columns [0, H).
    # TODO(synk): on v5e/v6e, shipping x over HBM as bfloat16 would halve the
    #             dominant traffic; kept f32 here to match the f32 reference.
    if H % 128 == 0 and S > 1:
        x2 = jnp.reshape(x, (B, S * H))
    else:
        x2 = x[:, 0, :]  # fallback: H not lane-aligned, slice CLS in XLA
    pp = jnp.asarray(parent_prob, jnp.float32).reshape(B, -1)
    y_i = jnp.asarray(y, jnp.int32).reshape(B, 1)
    if B_pad != B:  # only copies when B is not a multiple of tile_b
        x2 = jnp.pad(x2, ((0, B_pad - B), (0, 0)))
        pp = jnp.pad(pp, ((0, B_pad - B), (0, 0)))
        y_i = jnp.pad(y_i, ((0, B_pad - B), (0, 0)))
    thr = jnp.full((1, 1), threshold, jnp.float32)
    fw_t = jnp.asarray(params["fc_w"], jnp.float32).T        # (C, H), lane-dense

    vmem = pltpu.MemorySpace.VMEM
    smem = pltpu.MemorySpace.SMEM
    kernel = functools.partial(_gate_child_head_kernel,
                               n_valid=B, needs_mask=(B_pad != B))

    cost = pl.CostEstimate(
        flops=int(2 * B_pad * H * C + 16 * B_pad * H),
        transcendentals=int(B_pad * (H + 2 * C + 1)),
        bytes_accessed=int(4 * (B_pad * (H + P + C + 1) + n_tiles * 8 * 128
                                + H * (P + C + 3) + 3 * C + 1)),
    )

    probs_pad, partials = pl.pallas_call(
        kernel,
        out_shape=(jax.ShapeDtypeStruct((B_pad, C), jnp.float32),
                   jax.ShapeDtypeStruct((n_tiles, 8, 128), jnp.float32)),
        grid_spec=pltpu.PrefetchScalarGridSpec(
            num_scalar_prefetch=0,
            grid=(n_tiles,),
            in_specs=[
                pl.BlockSpec((tile_b, H), lambda i: (i, 0)),   # CLS rows of x
                pl.BlockSpec((tile_b, P), lambda i: (i, 0)),   # parent_prob
                pl.BlockSpec((tile_b, 1), lambda i: (i, 0)),   # y
                pl.BlockSpec(memory_space=smem),               # threshold scalar
                pl.BlockSpec(memory_space=vmem),               # ln gamma
                pl.BlockSpec(memory_space=vmem),               # ln beta
                pl.BlockSpec(memory_space=vmem),               # gate W (P, H)
                pl.BlockSpec(memory_space=vmem),               # gate b
                pl.BlockSpec(memory_space=vmem),               # fc W^T (C, H)
                pl.BlockSpec(memory_space=vmem),               # fc b
                pl.BlockSpec(memory_space=vmem),               # class weights
            ],
            out_specs=(
                pl.BlockSpec((tile_b, C), lambda i: (i, 0)),       # probs
                pl.BlockSpec((1, 8, 128), lambda i: (i, 0, 0)),    # loss partials
            ),
        ),
        compiler_params=pltpu.CompilerParams(
            dimension_semantics=("parallel",),
            vmem_limit_bytes=32 * 1024 * 1024,
        ),
        cost_estimate=cost,
    )(x2, pp, y_i, thr,
      params["ln_g"], params["ln_b"], params["gate_w"], params["gate_b"],
      fw_t, params["fc_b"], params["cls_w"])

    probs = probs_pad[:B]
    base_loss = jnp.sum(partials[:, 0, 0]) / B
    reg_loss = jnp.sum(partials[:, 0, 1]) / B
    return probs, base_loss + LAMBDA_REG * reg_loss


def _reference(x, y, parent_prob, threshold, params):
    """Pure-JAX reference mirroring the torch module semantics."""
    hi = jax.lax.Precision.HIGHEST
    x_cls = jnp.asarray(x, jnp.float32)[:, 0, :]
    mu = jnp.mean(x_cls, axis=-1, keepdims=True)
    var = jnp.mean((x_cls - mu) ** 2, axis=-1, keepdims=True)
    xn = (x_cls - mu) * lax.rsqrt(var + LN_EPS) * params["ln_g"] + params["ln_b"]
    pp = jnp.asarray(parent_prob, jnp.float32).reshape(x_cls.shape[0], -1)
    gate = jax.nn.sigmoid(jnp.dot(pp, params["gate_w"], precision=hi)
                          + params["gate_b"])
    logits = jnp.dot(xn * gate, params["fc_w"], precision=hi) + params["fc_b"]
    probs = jax.nn.softmax(logits, axis=-1)

    y_i = jnp.asarray(y, jnp.int32)
    log_sm = jax.nn.log_softmax(probs, axis=-1)
    w = params["cls_w"][0]
    base = jnp.mean(-w[y_i] * log_sm[jnp.arange(y_i.shape[0]), y_i])
    child_probs = jax.nn.softmax(probs, axis=-1)
    conflict = (pp[:, 0] >= threshold) & (jnp.argmax(child_probs, axis=1) == 0)
    loss = base + LAMBDA_REG * jnp.mean(conflict.astype(jnp.float32))
    return probs, loss


if __name__ == "__main__":
    B, S, H = 20, 4, 128          # hidden_dim = module default (lane-aligned)
    PARENT_CLASSES, CHILD_CLASSES = 1, 3
    THRESHOLD = 0.5

    key = jax.random.PRNGKey(0)
    kx, ky, kp, kparams = jax.random.split(key, 4)
    x = jax.random.normal(kx, (B, S, H), jnp.float32)
    y = jax.random.randint(ky, (B,), 0, CHILD_CLASSES)
    parent_prob = jax.random.uniform(kp, (B, 1), jnp.float32)
    params = init_params(kparams, PARENT_CLASSES, CHILD_CLASSES, H)

    # tile_b=8 -> 3 batch tiles plus a masked padded tail (exercises the grid).
    probs, loss = gate_child_head_forward(x, y, parent_prob, THRESHOLD, params,
                                          tile_b=8)
    jax.block_until_ready((probs, loss))

    probs_ref, loss_ref = _reference(x, y, parent_prob, THRESHOLD, params)
    assert probs.shape == (B, CHILD_CLASSES)
    assert jnp.allclose(probs, probs_ref, atol=2e-4, rtol=2e-4), "probs mismatch"
    assert jnp.allclose(loss, loss_ref, atol=2e-4, rtol=2e-4), "loss mismatch"

    print("KERNEL_OK")
</pallas_src>

<mosaic_0001>
module attributes {stable_mosaic.version = 11 : i64} {
  func.func @_gate_child_head_kernel(%arg0: i32, %arg1: memref<8x128xf32, #tpu.memory_space<vmem>>, %arg2: memref<8x1xf32, #tpu.memory_space<vmem>>, %arg3: memref<8x1xi32, #tpu.memory_space<vmem>>, %arg4: memref<1x1xf32, #tpu.memory_space<smem>>, %arg5: memref<1x128xf32, #tpu.memory_space<vmem>>, %arg6: memref<1x128xf32, #tpu.memory_space<vmem>>, %arg7: memref<1x128xf32, #tpu.memory_space<vmem>>, %arg8: memref<1x128xf32, #tpu.memory_space<vmem>>, %arg9: memref<3x128xf32, #tpu.memory_space<vmem>>, %arg10: memref<1x3xf32, #tpu.memory_space<vmem>>, %arg11: memref<1x3xf32, #tpu.memory_space<vmem>>, %arg12: memref<8x3xf32, #tpu.memory_space<vmem>>, %arg13: memref<1x8x128xf32, #tpu.memory_space<vmem>>) attributes {dimension_semantics = [#tpu.dimension_semantics<parallel>], iteration_bounds = array<i64: 3>, scalar_prefetch = 0 : i64, scratch_operands = 0 : i64, tpu.core_type = #tpu.core_type<tc>, window_params = [{transform_indices = @transform_0, window_bounds = array<i64: 8, 128>}, {transform_indices = @transform_1, window_bounds = array<i64: 8, 1>}, {transform_indices = @transform_2, window_bounds = array<i64: 8, 1>}, {transform_indices = @transform_3, window_bounds = array<i64: 1, 1>}, {pipeline_mode = #tpu.pipeline_mode<synchronous>, transform_indices = @transform_4, window_bounds = array<i64: 1, 128>}, {pipeline_mode = #tpu.pipeline_mode<synchronous>, transform_indices = @transform_5, window_bounds = array<i64: 1, 128>}, {pipeline_mode = #tpu.pipeline_mode<synchronous>, transform_indices = @transform_6, window_bounds = array<i64: 1, 128>}, {pipeline_mode = #tpu.pipeline_mode<synchronous>, transform_indices = @transform_7, window_bounds = array<i64: 1, 128>}, {pipeline_mode = #tpu.pipeline_mode<synchronous>, transform_indices = @transform_8, window_bounds = array<i64: 3, 128>}, {pipeline_mode = #tpu.pipeline_mode<synchronous>, transform_indices = @transform_9, window_bounds = array<i64: 1, 3>}, {pipeline_mode = #tpu.pipeline_mode<synchronous>, transform_indices = @transform_10, window_bounds = array<i64: 1, 3>}, {transform_indices = @transform_11, window_bounds = array<i64: 8, 3>}, {transform_indices = @transform_12, window_bounds = array<i64: 1, 8, 128>}]} {
    %c0 = arith.constant 0 : index
    %c0_0 = arith.constant 0 : index
    %0 = vector.load %arg1[%c0, %c0_0] : memref<8x128xf32, #tpu.memory_space<vmem>>, vector<8x128xf32>
    %c0_1 = arith.constant 0 : index
    %c0_2 = arith.constant 0 : index
    %1 = vector.load %arg2[%c0_1, %c0_2] : memref<8x1xf32, #tpu.memory_space<vmem>>, vector<8x1xf32>
    %cst = arith.constant dense<0.000000e+00> : vector<8xf32>
    %2 = vector.multi_reduction <add>, %0, %cst [1] : vector<8x128xf32> to vector<8xf32>
    %3 = vector.shape_cast %2 : vector<8xf32> to vector<8x1xf32>
    %cst_3 = arith.constant 1.280000e+02 : f32
    %4 = vector.broadcast %cst_3 : f32 to vector<8x1xf32>
    %5 = arith.divf %3, %4 : vector<8x1xf32>
    %6 = vector.broadcast %5 : vector<8x1xf32> to vector<8x128xf32>
    %7 = arith.subf %0, %6 : vector<8x128xf32>
    %8 = arith.mulf %7, %7 : vector<8x128xf32>
    %cst_4 = arith.constant dense<0.000000e+00> : vector<8xf32>
    %9 = vector.multi_reduction <add>, %8, %cst_4 [1] : vector<8x128xf32> to vector<8xf32>
    %10 = vector.shape_cast %9 : vector<8xf32> to vector<8x1xf32>
    %cst_5 = arith.constant 1.280000e+02 : f32
    %11 = vector.broadcast %cst_5 : f32 to vector<8x1xf32>
    %12 = arith.divf %10, %11 : vector<8x1xf32>
    %13 = vector.broadcast %5 : vector<8x1xf32> to vector<8x128xf32>
    %14 = arith.subf %0, %13 : vector<8x128xf32>
    %cst_6 = arith.constant 9.99999974E-6 : f32
    %15 = vector.broadcast %cst_6 : f32 to vector<8x1xf32>
    %16 = arith.addf %12, %15 : vector<8x1xf32>
    %17 = math.rsqrt %16 : vector<8x1xf32>
    %18 = vector.broadcast %17 : vector<8x1xf32> to vector<8x128xf32>
    %19 = arith.mulf %14, %18 : vector<8x128xf32>
    %c0_7 = arith.constant 0 : index
    %c0_8 = arith.constant 0 : index
    %20 = vector.load %arg5[%c0_7, %c0_8] : memref<1x128xf32, #tpu.memory_space<vmem>>, vector<1x128xf32>
    %21 = vector.broadcast %20 : vector<1x128xf32> to vector<8x128xf32>
    %22 = arith.mulf %19, %21 : vector<8x128xf32>
    %c0_9 = arith.constant 0 : index
    %c0_10 = arith.constant 0 : index
    %23 = vector.load %arg6[%c0_9, %c0_10] : memref<1x128xf32, #tpu.memory_space<vmem>>, vector<1x128xf32>
    %24 = vector.broadcast %23 : vector<1x128xf32> to vector<8x128xf32>
    %25 = arith.addf %22, %24 : vector<8x128xf32>
    %c0_11 = arith.constant 0 : index
    %c0_12 = arith.constant 0 : index
    %26 = vector.load %arg7[%c0_11, %c0_12] : memref<1x128xf32, #tpu.memory_space<vmem>>, vector<1x128xf32>
    %27 = vector.broadcast %1 : vector<8x1xf32> to vector<8x128xf32>
    %28 = vector.broadcast %26 : vector<1x128xf32> to vector<8x128xf32>
    %29 = arith.mulf %27, %28 : vector<8x128xf32>
    %c0_13 = arith.constant 0 : index
    %c0_14 = arith.constant 0 : index
    %30 = vector.load %arg8[%c0_13, %c0_14] : memref<1x128xf32, #tpu.memory_space<vmem>>, vector<1x128xf32>
    %31 = vector.broadcast %30 : vector<1x128xf32> to vector<8x128xf32>
    %32 = arith.addf %29, %31 : vector<8x128xf32>
    %33 = arith.negf %32 : vector<8x128xf32>
    %34 = math.exp %33 : vector<8x128xf32>
    %cst_15 = arith.constant 1.000000e+00 : f32
    %35 = vector.broadcast %cst_15 : f32 to vector<8x128xf32>
    %36 = arith.addf %35, %34 : vector<8x128xf32>
    %37 = arith.divf %35, %36 : vector<8x128xf32>
    %38 = arith.mulf %25, %37 : vector<8x128xf32>
    %39 = tpu.iota {dimensions = array<i32: 1>} : vector<8x3xi32>
    %cst_16 = arith.constant 0.000000e+00 : f32
    %40 = vector.broadcast %cst_16 : f32 to vector<8x3xf32>
    %c0_17 = arith.constant 0 : index
    %c0_18 = arith.constant 0 : index
    %41 = vector.load %arg10[%c0_17, %c0_18] : memref<1x3xf32, #tpu.memory_space<vmem>>, vector<1x3xf32>
    %42 = vector.broadcast %41 : vector<1x3xf32> to vector<8x3xf32>
    %43 = arith.addf %40, %42 : vector<8x3xf32>
    %c0_19 = arith.constant 0 : index
    %c0_20 = arith.constant 0 : index
    %44 = vector.load %arg9[%c0_19, %c0_20] : memref<3x128xf32, #tpu.memory_space<vmem>>, vector<1x128xf32>
    %45 = vector.broadcast %44 : vector<1x128xf32> to vector<8x128xf32>
    %46 = arith.mulf %38, %45 : vector<8x128xf32>
    %cst_21 = arith.constant dense<0.000000e+00> : vector<8xf32>
    %47 = vector.multi_reduction <add>, %46, %cst_21 [1] : vector<8x128xf32> to vector<8xf32>
    %48 = vector.shape_cast %47 : vector<8xf32> to vector<8x1xf32>
    %c0_i32 = arith.constant 0 : i32
    %49 = vector.broadcast %c0_i32 : i32 to vector<8x3xi32>
    %50 = arith.cmpi eq, %39, %49 : vector<8x3xi32>
    %cst_22 = arith.constant 0.000000e+00 : f32
    %51 = vector.shape_cast %48 : vector<8x1xf32> to vector<8x1xf32>
    %52 = vector.broadcast %51 : vector<8x1xf32> to vector<8x3xf32>
    %53 = vector.broadcast %cst_22 : f32 to vector<8x3xf32>
    %54 = arith.select %50, %52, %53 : vector<8x3xi1>, vector<8x3xf32>
    %55 = arith.addf %43, %54 : vector<8x3xf32>
    %c1 = arith.constant 1 : index
    %c0_23 = arith.constant 0 : index
    %56 = vector.load %arg9[%c1, %c0_23] : memref<3x128xf32, #tpu.memory_space<vmem>>, vector<1x128xf32>
    %57 = vector.broadcast %56 : vector<1x128xf32> to vector<8x128xf32>
    %58 = arith.mulf %38, %57 : vector<8x128xf32>
    %cst_24 = arith.constant dense<0.000000e+00> : vector<8xf32>
    %59 = vector.multi_reduction <add>, %58, %cst_24 [1] : vector<8x128xf32> to vector<8xf32>
    %60 = vector.shape_cast %59 : vector<8xf32> to vector<8x1xf32>
    %c1_i32 = arith.constant 1 : i32
    %61 = vector.broadcast %c1_i32 : i32 to vector<8x3xi32>
    %62 = arith.cmpi eq, %39, %61 : vector<8x3xi32>
    %cst_25 = arith.constant 0.000000e+00 : f32
    %63 = vector.shape_cast %60 : vector<8x1xf32> to vector<8x1xf32>
    %64 = vector.broadcast %63 : vector<8x1xf32> to vector<8x3xf32>
    %65 = vector.broadcast %cst_25 : f32 to vector<8x3xf32>
    %66 = arith.select %62, %64, %65 : vector<8x3xi1>, vector<8x3xf32>
    %67 = arith.addf %55, %66 : vector<8x3xf32>
    %c2 = arith.constant 2 : index
    %c0_26 = arith.constant 0 : index
    %68 = vector.load %arg9[%c2, %c0_26] : memref<3x128xf32, #tpu.memory_space<vmem>>, vector<1x128xf32>
    %69 = vector.broadcast %68 : vector<1x128xf32> to vector<8x128xf32>
    %70 = arith.mulf %38, %69 : vector<8x128xf32>
    %cst_27 = arith.constant dense<0.000000e+00> : vector<8xf32>
    %71 = vector.multi_reduction <add>, %70, %cst_27 [1] : vector<8x128xf32> to vector<8xf32>
    %72 = vector.shape_cast %71 : vector<8xf32> to vector<8x1xf32>
    %c2_i32 = arith.constant 2 : i32
    %73 = vector.broadcast %c2_i32 : i32 to vector<8x3xi32>
    %74 = arith.cmpi eq, %39, %73 : vector<8x3xi32>
    %cst_28 = arith.constant 0.000000e+00 : f32
    %75 = vector.shape_cast %72 : vector<8x1xf32> to vector<8x1xf32>
    %76 = vector.broadcast %75 : vector<8x1xf32> to vector<8x3xf32>
    %77 = vector.broadcast %cst_28 : f32 to vector<8x3xf32>
    %78 = arith.select %74, %76, %77 : vector<8x3xi1>, vector<8x3xf32>
    %79 = arith.addf %67, %78 : vector<8x3xf32>
    %cst_29 = arith.constant dense<0xFF800000> : vector<8xf32>
    %80 = vector.multi_reduction <maximumf>, %79, %cst_29 [1] : vector<8x3xf32> to vector<8xf32>
    %81 = vector.shape_cast %80 : vector<8xf32> to vector<8x1xf32>
    %82 = vector.broadcast %81 : vector<8x1xf32> to vector<8x3xf32>
    %83 = arith.subf %79, %82 : vector<8x3xf32>
    %84 = math.exp %83 : vector<8x3xf32>
    %cst_30 = arith.constant dense<0.000000e+00> : vector<8xf32>
    %85 = vector.multi_reduction <add>, %84, %cst_30 [1] : vector<8x3xf32> to vector<8xf32>
    %86 = vector.shape_cast %85 : vector<8xf32> to vector<8x1xf32>
    %87 = vector.broadcast %86 : vector<8x1xf32> to vector<8x3xf32>
    %88 = arith.divf %84, %87 : vector<8x3xf32>
    %c0_31 = arith.constant 0 : index
    %c0_32 = arith.constant 0 : index
    %89 = vector.load %arg12[%c0_31, %c0_32] : memref<8x3xf32, #tpu.memory_space<vmem>>, vector<8x3xf32>
    tpu.vector_store %arg12[%c0_31, %c0_32], %88 {strides = array<i32>} : memref<8x3xf32, #tpu.memory_space<vmem>>, vector<8x3xf32>,
    %cst_33 = arith.constant dense<0xFF800000> : vector<8xf32>
    %90 = vector.multi_reduction <maximumf>, %88, %cst_33 [1] : vector<8x3xf32> to vector<8xf32>
    %91 = vector.shape_cast %90 : vector<8xf32> to vector<8x1xf32>
    %92 = vector.broadcast %91 : vector<8x1xf32> to vector<8x3xf32>
    %93 = arith.subf %88, %92 : vector<8x3xf32>
    %94 = math.exp %93 : vector<8x3xf32>
    %cst_34 = arith.constant dense<0.000000e+00> : vector<8xf32>
    %95 = vector.multi_reduction <add>, %94, %cst_34 [1] : vector<8x3xf32> to vector<8xf32>
    %96 = vector.shape_cast %95 : vector<8xf32> to vector<8x1xf32>
    %97 = math.log %96 : vector<8x1xf32>
    %98 = arith.addf %97, %91 : vector<8x1xf32>
    %99 = vector.broadcast %98 : vector<8x1xf32> to vector<8x3xf32>
    %100 = arith.subf %88, %99 : vector<8x3xf32>
    %c0_35 = arith.constant 0 : index
    %c0_36 = arith.constant 0 : index
    %101 = vector.load %arg3[%c0_35, %c0_36] : memref<8x1xi32, #tpu.memory_space<vmem>>, vector<8x1xi32>
    %102 = vector.broadcast %101 : vector<8x1xi32> to vector<8x3xi32>
    %103 = arith.cmpi eq, %39, %102 : vector<8x3xi32>
    %104 = arith.extui %103 : vector<8x3xi1> to vector<8x3xi32>
    %105 = arith.sitofp %104 : vector<8x3xi32> to vector<8x3xf32>
    %106 = arith.mulf %100, %105 : vector<8x3xf32>
    %cst_37 = arith.constant dense<0.000000e+00> : vector<8xf32>
    %107 = vector.multi_reduction <add>, %106, %cst_37 [1] : vector<8x3xf32> to vector<8xf32>
    %108 = vector.shape_cast %107 : vector<8xf32> to vector<8x1xf32>
    %c0_38 = arith.constant 0 : index
    %c0_39 = arith.constant 0 : index
    %109 = vector.load %arg11[%c0_38, %c0_39] : memref<1x3xf32, #tpu.memory_space<vmem>>, vector<1x3xf32>
    %110 = vector.broadcast %109 : vector<1x3xf32> to vector<8x3xf32>
    %111 = arith.mulf %110, %105 : vector<8x3xf32>
    %cst_40 = arith.constant dense<0.000000e+00> : vector<8xf32>
    %112 = vector.multi_reduction <add>, %111, %cst_40 [1] : vector<8x3xf32> to vector<8xf32>
    %113 = vector.shape_cast %112 : vector<8xf32> to vector<8x1xf32>
    %cst_41 = arith.constant 0.000000e+00 : f32
    %114 = vector.broadcast %cst_41 : f32 to vector<8x1xf32>
    %115 = arith.subf %114, %113 : vector<8x1xf32>
    %116 = arith.mulf %115, %108 : vector<8x1xf32>
    %c0_42 = arith.constant 0 : index
    %c0_43 = arith.constant 0 : index
    %117 = memref.load %arg4[%c0_42, %c0_43] : memref<1x1xf32, #tpu.memory_space<smem>>
    %118 = vector.broadcast %117 : f32 to vector<8x1xf32>
    %119 = arith.cmpf oge, %1, %118 : vector<8x1xf32>
    %120 = vector.extract_strided_slice %88 {offsets = [0, 0], sizes = [8, 1], strides = [1, 1]} : vector<8x3xf32> to vector<8x1xf32>
    %121 = arith.cmpf oge, %120, %91 : vector<8x1xf32>
    %122 = arith.andi %119, %121 : vector<8x1xi1>
    %123 = arith.extui %122 : vector<8x1xi1> to vector<8x1xi32>
    %124 = arith.sitofp %123 : vector<8x1xi32> to vector<8x1xf32>
    %125 = tpu.iota {dimensions = array<i32: 0>} : vector<8x1xi32>
    %c8_i32 = arith.constant 8 : i32
    %126 = arith.muli %arg0, %c8_i32 : i32
    %127 = vector.broadcast %126 : i32 to vector<8x1xi32>
    %128 = arith.addi %125, %127 : vector<8x1xi32>
    %c20_i32 = arith.constant 20 : i32
    %129 = vector.broadcast %c20_i32 : i32 to vector<8x1xi32>
    %130 = arith.cmpi slt, %128, %129 : vector<8x1xi32>
    %cst_44 = arith.constant 0.000000e+00 : f32
    %131 = vector.broadcast %cst_44 : f32 to vector<8x1xf32>
    %132 = arith.select %130, %116, %131 : vector<8x1xi1>, vector<8x1xf32>
    %cst_45 = arith.constant 0.000000e+00 : f32
    %133 = vector.broadcast %cst_45 : f32 to vector<8x1xf32>
    %134 = arith.select %130, %124, %133 : vector<8x1xi1>, vector<8x1xf32>
    %cst_46 = arith.constant dense<0.000000e+00> : vector<1xf32>
    %135 = vector.multi_reduction <add>, %132, %cst_46 [0] : vector<8x1xf32> to vector<1xf32>
    %136 = vector.shape_cast %135 : vector<1xf32> to vector<1x1xf32>
    %cst_47 = arith.constant dense<0.000000e+00> : vector<1xf32>
    %137 = vector.multi_reduction <add>, %134, %cst_47 [0] : vector<8x1xf32> to vector<1xf32>
    %138 = vector.shape_cast %137 : vector<1xf32> to vector<1x1xf32>
    %139 = tpu.iota {dimensions = array<i32: 2>} : vector<1x8x128xi32>
    %c0_i32_48 = arith.constant 0 : i32
    %140 = vector.broadcast %c0_i32_48 : i32 to vector<1x8x128xi32>
    %141 = arith.cmpi eq, %139, %140 : vector<1x8x128xi32>
    %c1_i32_49 = arith.constant 1 : i32
    %142 = vector.broadcast %c1_i32_49 : i32 to vector<1x8x128xi32>
    %143 = arith.cmpi eq, %139, %142 : vector<1x8x128xi32>
    %cst_50 = arith.constant 0.000000e+00 : f32
    %144 = vector.shape_cast %138 : vector<1x1xf32> to vector<1x1x1xf32>
    %145 = vector.broadcast %144 : vector<1x1x1xf32> to vector<1x8x128xf32>
    %146 = vector.broadcast %cst_50 : f32 to vector<1x8x128xf32>
    %147 = arith.select %143, %145, %146 : vector<1x8x128xi1>, vector<1x8x128xf32>
    %148 = vector.shape_cast %136 : vector<1x1xf32> to vector<1x1x1xf32>
    %149 = vector.broadcast %148 : vector<1x1x1xf32> to vector<1x8x128xf32>
    %150 = arith.select %141, %149, %147 : vector<1x8x128xi1>, vector<1x8x128xf32>
    %c0_51 = arith.constant 0 : index
    %c0_52 = arith.constant 0 : index
    %c0_53 = arith.constant 0 : index
    %151 = vector.load %arg13[%c0_51, %c0_52, %c0_53] : memref<1x8x128xf32, #tpu.memory_space<vmem>>, vector<1x8x128xf32>
    tpu.vector_store %arg13[%c0_51, %c0_52, %c0_53], %150 {strides = array<i32>} : memref<1x8x128xf32, #tpu.memory_space<vmem>>, vector<1x8x128xf32>,
    return
  }
  func.func @transform_0(%arg0: i32) -> (i32, i32) {
    %c0_i32 = arith.constant 0 : i32
    %c0_i32_0 = arith.constant 0 : i32
    return %arg0, %c0_i32 : i32, i32
  }
  func.func @transform_1(%arg0: i32) -> (i32, i32) {
    %c0_i32 = arith.constant 0 : i32
    %c0_i32_0 = arith.constant 0 : i32
    return %arg0, %c0_i32 : i32, i32
  }
  func.func @transform_2(%arg0: i32) -> (i32, i32) {
    %c0_i32 = arith.constant 0 : i32
    %c0_i32_0 = arith.constant 0 : i32
    return %arg0, %c0_i32 : i32, i32
  }
  func.func @transform_3(%arg0: i32) -> (i32, i32) {
    %c0_i32 = arith.constant 0 : i32
    %c0_i32_0 = arith.constant 0 : i32
    %c0_i32_1 = arith.constant 0 : i32
    return %c0_i32, %c0_i32_0 : i32, i32
  }
  func.func @transform_4(%arg0: i32) -> (i32, i32) {
    %c0_i32 = arith.constant 0 : i32
    %c0_i32_0 = arith.constant 0 : i32
    %c0_i32_1 = arith.constant 0 : i32
    return %c0_i32, %c0_i32_0 : i32, i32
  }
  func.func @transform_5(%arg0: i32) -> (i32, i32) {
    %c0_i32 = arith.constant 0 : i32
    %c0_i32_0 = arith.constant 0 : i32
    %c0_i32_1 = arith.constant 0 : i32
    return %c0_i32, %c0_i32_0 : i32, i32
  }
  func.func @transform_6(%arg0: i32) -> (i32, i32) {
    %c0_i32 = arith.constant 0 : i32
    %c0_i32_0 = arith.constant 0 : i32
    %c0_i32_1 = arith.constant 0 : i32
    return %c0_i32, %c0_i32_0 : i32, i32
  }
  func.func @transform_7(%arg0: i32) -> (i32, i32) {
    %c0_i32 = arith.constant 0 : i32
    %c0_i32_0 = arith.constant 0 : i32
    %c0_i32_1 = arith.constant 0 : i32
    return %c0_i32, %c0_i32_0 : i32, i32
  }
  func.func @transform_8(%arg0: i32) -> (i32, i32) {
    %c0_i32 = arith.constant 0 : i32
    %c0_i32_0 = arith.constant 0 : i32
    %c0_i32_1 = arith.constant 0 : i32
    return %c0_i32, %c0_i32_0 : i32, i32
  }
  func.func @transform_9(%arg0: i32) -> (i32, i32) {
    %c0_i32 = arith.constant 0 : i32
    %c0_i32_0 = arith.constant 0 : i32
    %c0_i32_1 = arith.constant 0 : i32
    return %c0_i32, %c0_i32_0 : i32, i32
  }
  func.func @transform_10(%arg0: i32) -> (i32, i32) {
    %c0_i32 = arith.constant 0 : i32
    %c0_i32_0 = arith.constant 0 : i32
    %c0_i32_1 = arith.constant 0 : i32
    return %c0_i32, %c0_i32_0 : i32, i32
  }
  func.func @transform_11(%arg0: i32) -> (i32, i32) {
    %c0_i32 = arith.constant 0 : i32
    %c0_i32_0 = arith.constant 0 : i32
    return %arg0, %c0_i32 : i32, i32
  }
  func.func @transform_12(%arg0: i32) -> (i32, i32, i32) {
    %c0_i32 = arith.constant 0 : i32
    %c0_i32_0 = arith.constant 0 : i32
    %c0_i32_1 = arith.constant 0 : i32
    return %arg0, %c0_i32, %c0_i32_0 : i32, i32, i32
  }
}

</mosaic_0001>

<llo_original>
// kernel: tpu_custom_call.1
$region0: #{tpu_custom_call.1}
  #allocation0 [shape = 'u32[]', space=smem, size = 0x4, offset = 0x4, fixed_abs, tag = 'smem constant byte address 0x4 - core index']
  #allocation1 [shape = 'u32[144,128]{1,0:T(1,128)}', space=vmem, size = 0x12000, scoped, tag = 'internal scratch']
  #allocation2 [shape = 'f32[1,1]{1,0:T(1,128)S(6)}', space=smem, size = 0x200, scoped, tag = 'scoped memory for tpu_custom_call.1']
  %s0 = inlined_call_operand.hbm [shape: f32[24,512], index: 0, kind: input, shape index: {}]
  %s1 = inlined_call_operand.vmem [shape: f32[24,1], index: 1, kind: input, shape index: {}]
  %s2 = inlined_call_operand.vmem [shape: s32[24,1], index: 2, kind: input, shape index: {}]
  %s3 = inlined_call_operand.<no memory space> [shape: f32[1,1], index: 3, kind: input, shape index: {}]
  %s4 = inlined_call_operand.vmem [shape: f32[1,128], index: 4, kind: input, shape index: {}]
  %s5 = inlined_call_operand.vmem [shape: f32[1,128], index: 5, kind: input, shape index: {}]
  %s6 = inlined_call_operand.vmem [shape: f32[1,128], index: 6, kind: input, shape index: {}]
  %s7 = inlined_call_operand.vmem [shape: f32[1,128], index: 7, kind: input, shape index: {}]
  %s8 = inlined_call_operand.vmem [shape: f32[3,128], index: 8, kind: input, shape index: {}]
  %s9 = inlined_call_operand.vmem [shape: f32[1,3], index: 9, kind: input, shape index: {}]
  %s10 = inlined_call_operand.vmem [shape: f32[1,3], index: 10, kind: input, shape index: {}]
  %s11 = inlined_call_operand.vmem [shape: f32[24,3], index: 11, kind: output, shape index: {0}]
  %s12 = inlined_call_operand.hbm [shape: f32[3,8,128], index: 12, kind: output, shape index: {1}]
  %13 = xla_tuple %s11, %s12
  %s14 = sld [smem:[#allocation0]]
  $region89: #{tpu_custom_call.1} parent=0
    _
  %s16 = ssub.s32 1, %s14
  %s17 = scalar_select 0, %s16, %s14
  %18 = sst [smem:[#allocation2]] %s3
  $region1: #{tpu_custom_call.1} parent=0
    #allocation3 [shape = 'u8[8192]{0}', space=vmem, size = 0x2000, scoped, tag = 'input window, operand 0']
    #allocation4 [shape = 's32[2]{0}', space=sflag, size = 0x8, scoped, tag = 'scoped memory for tpu_custom_call.1']
    #allocation5 [shape = 's32[2]{0}', space=sflag, size = 0x8, scoped, tag = 'scoped memory for tpu_custom_call.1']
    #allocation6 [shape = 'u8[8192]{0}', space=vmem, size = 0x2000, scoped, tag = 'output window, operand 1']
    %19 = vsyncpa [#allocation4], 0
    %s20 = scalar_lea.sflag [#allocation4], 1
    %21 = vsyncpa %s20, 0
    %22 = vsyncpa [#allocation5], 0
    %s23 = scalar_lea.sflag [#allocation5], 1
    %24 = vsyncpa %s23, 0
    loop: start=0, step=1, limit=5
    $region2: #{tpu_custom_call.1} parent=1 // loop_pre_header
      _
    $region3: #{tpu_custom_call.1} parent=1 // loop_header
      %s26 = sphi 0, %s30
      %p27 = scmp.ge.s32.totalorder %s26, 5
      %s36 = sphi 0, %s38
      %s39 = sphi 0, %s36
      %s40 = sphi 0, %s39
      %s56 = sphi 0, %s40
      %s62 = sphi 0, %s64
      %s65 = sphi 0, %s62
      %s66 = sphi 0, %s65
      %s82 = sphi 0, %s66
      %s88 = sphi 0, %s90
      %s91 = sphi 0, %s88
      %s92 = sphi 0, %s91
      %s108 = sphi 0, %s92
      %s112 = sphi 0, %s112
      %s114 = sphi 0, %s112
      %s115 = sphi 0, %s114
      %s129 = sphi 0, %s115
      %s133 = sphi 0, %s133
      %s135 = sphi 0, %s133
      %s136 = sphi 0, %s135
      %s150 = sphi 0, %s136
      %s154 = sphi 0, %s154
      %s156 = sphi 0, %s154
      %s157 = sphi 0, %s156
      %s171 = sphi 0, %s157
      %s175 = sphi 0, %s175
      %s177 = sphi 0, %s175
      %s178 = sphi 0, %s177
      %s192 = sphi 0, %s178
      %s196 = sphi 0, %s196
      %s198 = sphi 0, %s196
      %s199 = sphi 0, %s198
      %s213 = sphi 0, %s199
      %s217 = sphi 0, %s217
      %s219 = sphi 0, %s217
      %s220 = sphi 0, %s219
      %s234 = sphi 0, %s220
      %s238 = sphi 0, %s238
      %s240 = sphi 0, %s238
      %s241 = sphi 0, %s240
      %s255 = sphi 0, %s241
      %s259 = sphi 0, %s259
      %s261 = sphi 0, %s259
      %s262 = sphi 0, %s261
      %s276 = sphi 0, %s262
      %s282 = sphi 0, %s284
      %s285 = sphi 0, %s282
      %s286 = sphi 0, %s285
      %s302 = sphi 0, %s286
      %s308 = sphi 0, %s310
      %s311 = sphi 0, %s308
      %s312 = sphi 0, %s311
      %s328 = sphi 0, %s312
    $region4: #{tpu_custom_call.1} parent=1 // loop_header_branch
      %29 = sbr.rel (%p27) target = $region8
    $region5: #{tpu_custom_call.1} parent=1 // loop_body
      %s31 = ssub.s32 %s26, 1
      %s32 = ssub.s32 %s26, 2
      %s33 = sadd.s32 %s26, 1
      %s34 = ssub.s32 %s26, %s33
      %p35 = scmp.eq.s32.totalorder %s34, 0
      %s37 = sadd.s32 %s36, 1
      %s38 = scalar_select %p35, %s36, %s37
      %p41 = pneg %p35
      %p42 = scmp.eq.s32.totalorder %s26, 2
      %p43 = por %p41, %p42
      %p44 = scmp.ne.s32.totalorder %s36, %s39
      %p45 = scmp.eq.s32.totalorder %s26, 0
      %p46 = por %p44, %p45
      %p47 = scmp.ne.s32.totalorder %s36, %s39
      %p48 = scmp.eq.s32.totalorder %s31, 2
      %p49 = por %p47, %p48
      %p50 = scmp.ne.s32.totalorder %s39, %s40
      %p51 = scmp.eq.s32.totalorder %s31, 0
      %p52 = por %p50, %p51
      %p53 = scmp.ne.s32.totalorder %s39, %s40
      %p54 = scmp.eq.s32.totalorder %s32, 2
      %p55 = por %p53, %p54
      %p57 = scmp.ne.s32.totalorder %s40, %s56
      %p58 = scmp.eq.s32.totalorder %s32, 0
      %p59 = por %p57, %p58
      %s60 = ssub.s32 %s26, %s33
      %p61 = scmp.eq.s32.totalorder %s60, 0
      %s63 = sadd.s32 %s62, 1
      %s64 = scalar_select %p61, %s62, %s63
      %p67 = pneg %p61
      %p68 = scmp.eq.s32.totalorder %s26, 2
      %p69 = por %p67, %p68
      %p70 = scmp.ne.s32.totalorder %s62, %s65
      %p71 = scmp.eq.s32.totalorder %s26, 0
      %p72 = por %p70, %p71
      %p73 = scmp.ne.s32.totalorder %s62, %s65
      %p74 = scmp.eq.s32.totalorder %s31, 2
      %p75 = por %p73, %p74
      %p76 = scmp.ne.s32.totalorder %s65, %s66
      %p77 = scmp.eq.s32.totalorder %s31, 0
      %p78 = por %p76, %p77
      %p79 = scmp.ne.s32.totalorder %s65, %s66
      %p80 = scmp.eq.s32.totalorder %s32, 2
      %p81 = por %p79, %p80
      %p83 = scmp.ne.s32.totalorder %s66, %s82
      %p84 = scmp.eq.s32.totalorder %s32, 0
      %p85 = por %p83, %p84
      %s86 = ssub.s32 %s26, %s33
      %p87 = scmp.eq.s32.totalorder %s86, 0
      %s89 = sadd.s32 %s88, 1
      %s90 = scalar_select %p87, %s88, %s89
      %p93 = pneg %p87
      %p94 = scmp.eq.s32.totalorder %s26, 2
      %p95 = por %p93, %p94
      %p96 = scmp.ne.s32.totalorder %s88, %s91
      %p97 = scmp.eq.s32.totalorder %s26, 0
      %p98 = por %p96, %p97
      %p99 = scmp.ne.s32.totalorder %s88, %s91
      %p100 = scmp.eq.s32.totalorder %s31, 2
      %p101 = por %p99, %p100
      %p102 = scmp.ne.s32.totalorder %s91, %s92
      %p103 = scmp.eq.s32.totalorder %s31, 0
      %p104 = por %p102, %p103
      %p105 = scmp.ne.s32.totalorder %s91, %s92
      %p106 = scmp.eq.s32.totalorder %s32, 2
      %p107 = por %p105, %p106
      %p109 = scmp.ne.s32.totalorder %s92, %s108
      %p110 = scmp.eq.s32.totalorder %s32, 0
      %p111 = por %p109, %p110
      %s113 = sadd.s32 %s112, 1
      %p116 = scmp.eq.s32.totalorder %s26, 2
      %p117 = scmp.ne.s32.totalorder %s112, %s114
      %p118 = scmp.eq.s32.totalorder %s26, 0
      %p119 = por %p117, %p118
      %p120 = scmp.ne.s32.totalorder %s112, %s114
      %p121 = scmp.eq.s32.totalorder %s31, 2
      %p122 = por %p120, %p121
      %p123 = scmp.ne.s32.totalorder %s114, %s115
      %p124 = scmp.eq.s32.totalorder %s31, 0
      %p125 = por %p123, %p124
      %p126 = scmp.ne.s32.totalorder %s114, %s115
      %p127 = scmp.eq.s32.totalorder %s32, 2
      %p128 = por %p126, %p127
      %p130 = scmp.ne.s32.totalorder %s115, %s129
      %p131 = scmp.eq.s32.totalorder %s32, 0
      %p132 = por %p130, %p131
      %s134 = sadd.s32 %s133, 1
      %p137 = scmp.eq.s32.totalorder %s26, 2
      %p138 = scmp.ne.s32.totalorder %s133, %s135
      %p139 = scmp.eq.s32.totalorder %s26, 0
      %p140 = por %p138, %p139
      %p141 = scmp.ne.s32.totalorder %s133, %s135
      %p142 = scmp.eq.s32.totalorder %s31, 2
      %p143 = por %p141, %p142
      %p144 = scmp.ne.s32.totalorder %s135, %s136
      %p145 = scmp.eq.s32.totalorder %s31, 0
      %p146 = por %p144, %p145
      %p147 = scmp.ne.s32.totalorder %s135, %s136
      %p148 = scmp.eq.s32.totalorder %s32, 2
      %p149 = por %p147, %p148
      %p151 = scmp.ne.s32.totalorder %s136, %s150
      %p152 = scmp.eq.s32.totalorder %s32, 0
      %p153 = por %p151, %p152
      %s155 = sadd.s32 %s154, 1
      %p158 = scmp.eq.s32.totalorder %s26, 2
      %p159 = scmp.ne.s32.totalorder %s154, %s156
      %p160 = scmp.eq.s32.totalorder %s26, 0
      %p161 = por %p159, %p160
      %p162 = scmp.ne.s32.totalorder %s154, %s156
      %p163 = scmp.eq.s32.totalorder %s31, 2
      %p164 = por %p162, %p163
      %p165 = scmp.ne.s32.totalorder %s156, %s157
      %p166 = scmp.eq.s32.totalorder %s31, 0
      %p167 = por %p165, %p166
      %p168 = scmp.ne.s32.totalorder %s156, %s157
      %p169 = scmp.eq.s32.totalorder %s32, 2
      %p170 = por %p168, %p169
      %p172 = scmp.ne.s32.totalorder %s157, %s171
      %p173 = scmp.eq.s32.totalorder %s32, 0
      %p174 = por %p172, %p173
      %s176 = sadd.s32 %s175, 1
      %p179 = scmp.eq.s32.totalorder %s26, 2
      %p180 = scmp.ne.s32.totalorder %s175, %s177
      %p181 = scmp.eq.s32.totalorder %s26, 0
      %p182 = por %p180, %p181
      %p183 = scmp.ne.s32.totalorder %s175, %s177
      %p184 = scmp.eq.s32.totalorder %s31, 2
      %p185 = por %p183, %p184
      %p186 = scmp.ne.s32.totalorder %s177, %s178
      %p187 = scmp.eq.s32.totalorder %s31, 0
      %p188 = por %p186, %p187
      %p189 = scmp.ne.s32.totalorder %s177, %s178
      %p190 = scmp.eq.s32.totalorder %s32, 2
      %p191 = por %p189, %p190
      %p193 = scmp.ne.s32.totalorder %s178, %s192
      %p194 = scmp.eq.s32.totalorder %s32, 0
      %p195 = por %p193, %p194
      %s197 = sadd.s32 %s196, 1
      %p200 = scmp.eq.s32.totalorder %s26, 2
      %p201 = scmp.ne.s32.totalorder %s196, %s198
      %p202 = scmp.eq.s32.totalorder %s26, 0
      %p203 = por %p201, %p202
      %p204 = scmp.ne.s32.totalorder %s196, %s198
      %p205 = scmp.eq.s32.totalorder %s31, 2
      %p206 = por %p204, %p205
      %p207 = scmp.ne.s32.totalorder %s198, %s199
      %p208 = scmp.eq.s32.totalorder %s31, 0
      %p209 = por %p207, %p208
      %p210 = scmp.ne.s32.totalorder %s198, %s199
      %p211 = scmp.eq.s32.totalorder %s32, 2
      %p212 = por %p210, %p211
      %p214 = scmp.ne.s32.totalorder %s199, %s213
      %p215 = scmp.eq.s32.totalorder %s32, 0
      %p216 = por %p214, %p215
      %s218 = sadd.s32 %s217, 1
      %p221 = scmp.eq.s32.totalorder %s26, 2
      %p222 = scmp.ne.s32.totalorder %s217, %s219
      %p223 = scmp.eq.s32.totalorder %s26, 0
      %p224 = por %p222, %p223
      %p225 = scmp.ne.s32.totalorder %s217, %s219
      %p226 = scmp.eq.s32.totalorder %s31, 2
      %p227 = por %p225, %p226
      %p228 = scmp.ne.s32.totalorder %s219, %s220
      %p229 = scmp.eq.s32.totalorder %s31, 0
      %p230 = por %p228, %p229
      %p231 = scmp.ne.s32.totalorder %s219, %s220
      %p232 = scmp.eq.s32.totalorder %s32, 2
      %p233 = por %p231, %p232
      %p235 = scmp.ne.s32.totalorder %s220, %s234
      %p236 = scmp.eq.s32.totalorder %s32, 0
      %p237 = por %p235, %p236
      %s239 = sadd.s32 %s238, 1
      %p242 = scmp.eq.s32.totalorder %s26, 2
      %p243 = scmp.ne.s32.totalorder %s238, %s240
      %p244 = scmp.eq.s32.totalorder %s26, 0
      %p245 = por %p243, %p244
      %p246 = scmp.ne.s32.totalorder %s238, %s240
      %p247 = scmp.eq.s32.totalorder %s31, 2
      %p248 = por %p246, %p247
      %p249 = scmp.ne.s32.totalorder %s240, %s241
      %p250 = scmp.eq.s32.totalorder %s31, 0
      %p251 = por %p249, %p250
      %p252 = scmp.ne.s32.totalorder %s240, %s241
      %p253 = scmp.eq.s32.totalorder %s32, 2
      %p254 = por %p252, %p253
      %p256 = scmp.ne.s32.totalorder %s241, %s255
      %p257 = scmp.eq.s32.totalorder %s32, 0
      %p258 = por %p256, %p257
      %s260 = sadd.s32 %s259, 1
      %p263 = scmp.eq.s32.totalorder %s26, 2
      %p264 = scmp.ne.s32.totalorder %s259, %s261
      %p265 = scmp.eq.s32.totalorder %s26, 0
      %p266 = por %p264, %p265
      %p267 = scmp.ne.s32.totalorder %s259, %s261
      %p268 = scmp.eq.s32.totalorder %s31, 2
      %p269 = por %p267, %p268
      %p270 = scmp.ne.s32.totalorder %s261, %s262
      %p271 = scmp.eq.s32.totalorder %s31, 0
      %p272 = por %p270, %p271
      %p273 = scmp.ne.s32.totalorder %s261, %s262
      %p274 = scmp.eq.s32.totalorder %s32, 2
      %p275 = por %p273, %p274
      %p277 = scmp.ne.s32.totalorder %s262, %s276
      %p278 = scmp.eq.s32.totalorder %s32, 0
      %p279 = por %p277, %p278
      %s280 = ssub.s32 %s26, %s33
      %p281 = scmp.eq.s32.totalorder %s280, 0
      %s283 = sadd.s32 %s282, 1
      %s284 = scalar_select %p281, %s282, %s283
      %p287 = pneg %p281
      %p288 = scmp.eq.s32.totalorder %s26, 2
      %p289 = por %p287, %p288
      %p290 = scmp.ne.s32.totalorder %s282, %s285
      %p291 = scmp.eq.s32.totalorder %s26, 0
      %p292 = por %p290, %p291
      %p293 = scmp.ne.s32.totalorder %s282, %s285
      %p294 = scmp.eq.s32.totalorder %s31, 2
      %p295 = por %p293, %p294
      %p296 = scmp.ne.s32.totalorder %s285, %s286
      %p297 = scmp.eq.s32.totalorder %s31, 0
      %p298 = por %p296, %p297
      %p299 = scmp.ne.s32.totalorder %s285, %s286
      %p300 = scmp.eq.s32.totalorder %s32, 2
      %p301 = por %p299, %p300
      %p303 = scmp.ne.s32.totalorder %s286, %s302
      %p304 = scmp.eq.s32.totalorder %s32, 0
      %p305 = por %p303, %p304
      %s306 = ssub.s32 %s26, %s33
      %p307 = scmp.eq.s32.totalorder %s306, 0
      %s309 = sadd.s32 %s308, 1
      %s310 = scalar_select %p307, %s308, %s309
      %p313 = pneg %p307
      %p314 = scmp.eq.s32.totalorder %s26, 2
      %p315 = por %p313, %p314
      %p316 = scmp.ne.s32.totalorder %s308, %s311
      %p317 = scmp.eq.s32.totalorder %s26, 0
      %p318 = por %p316, %p317
      %p319 = scmp.ne.s32.totalorder %s308, %s311
      %p320 = scmp.eq.s32.totalorder %s31, 2
      %p321 = por %p319, %p320
      %p322 = scmp.ne.s32.totalorder %s311, %s312
      %p323 = scmp.eq.s32.totalorder %s31, 0
      %p324 = por %p322, %p323
      %p325 = scmp.ne.s32.totalorder %s311, %s312
      %p326 = scmp.eq.s32.totalorder %s32, 2
      %p327 = por %p325, %p326
      %p329 = scmp.ne.s32.totalorder %s312, %s328
      %p330 = scmp.eq.s32.totalorder %s32, 0
      %p331 = por %p329, %p330
      %p332 = scmp.le.s32.totalorder 1, %s26
      %p333 = scmp.lt.s32.totalorder %s26, 4
      %p334 = pnand %p332, %p333
      %p335 = pneg %p334
      // Predicated region
      $region9: #{tpu_custom_call.1} parent=5 // pred_check
        _
      $region10: #{tpu_custom_call.1} parent=5 // pred_check_branch
        %337 = sbr.rel (%p334) target = $region12
      $region11: #{tpu_custom_call.1} parent=5 // pred_region
        %s338 = ssub.s32 %s26, 1
        // Predicated region
        $region13: #{tpu_custom_call.1} parent=11 // pred_check
          %p339 = pneg %p125
        $region14: #{tpu_custom_call.1} parent=11 // pred_check_branch
          %341 = sbr.rel (%p339) target = $region16
        $region15: #{tpu_custom_call.1} parent=11 // pred_region
          _
        $region16: #{tpu_custom_call.1} parent=11 // pred_fallthru
          _
        // Predicated region
        $region17: #{tpu_custom_call.1} parent=11 // pred_check
          %p342 = pneg %p146
        $region18: #{tpu_custom_call.1} parent=11 // pred_check_branch
          %344 = sbr.rel (%p342) target = $region20
        $region19: #{tpu_custom_call.1} parent=11 // pred_region
          _
        $region20: #{tpu_custom_call.1} parent=11 // pred_fallthru
          _
        // Predicated region
        $region21: #{tpu_custom_call.1} parent=11 // pred_check
          %p345 = pneg %p167
        $region22: #{tpu_custom_call.1} parent=11 // pred_check_branch
          %347 = sbr.rel (%p345) target = $region24
        $region23: #{tpu_custom_call.1} parent=11 // pred_region
          _
        $region24: #{tpu_custom_call.1} parent=11 // pred_fallthru
          _
        // Predicated region
        $region25: #{tpu_custom_call.1} parent=11 // pred_check
          %p348 = pneg %p188
        $region26: #{tpu_custom_call.1} parent=11 // pred_check_branch
          %350 = sbr.rel (%p348) target = $region28
        $region27: #{tpu_custom_call.1} parent=11 // pred_region
          _
        $region28: #{tpu_custom_call.1} parent=11 // pred_fallthru
          _
        // Predicated region
        $region29: #{tpu_custom_call.1} parent=11 // pred_check
          %p351 = pneg %p209
        $region30: #{tpu_custom_call.1} parent=11 // pred_check_branch
          %353 = sbr.rel (%p351) target = $region32
        $region31: #{tpu_custom_call.1} parent=11 // pred_region
          _
        $region32: #{tpu_custom_call.1} parent=11 // pred_fallthru
          _
        // Predicated region
        $region33: #{tpu_custom_call.1} parent=11 // pred_check
          %p354 = pneg %p230
        $region34: #{tpu_custom_call.1} parent=11 // pred_check_branch
          %356 = sbr.rel (%p354) target = $region36
        $region35: #{tpu_custom_call.1} parent=11 // pred_region
          _
        $region36: #{tpu_custom_call.1} parent=11 // pred_fallthru
          _
        // Predicated region
        $region37: #{tpu_custom_call.1} parent=11 // pred_check
          %p357 = pneg %p251
        $region38: #{tpu_custom_call.1} parent=11 // pred_check_branch
          %359 = sbr.rel (%p357) target = $region40
        $region39: #{tpu_custom_call.1} parent=11 // pred_region
          _
        $region40: #{tpu_custom_call.1} parent=11 // pred_fallthru
          _
        // Predicated region
        $region41: #{tpu_custom_call.1} parent=11 // pred_check
          %p360 = pneg %p272
        $region42: #{tpu_custom_call.1} parent=11 // pred_check_branch
          %362 = sbr.rel (%p360) target = $region44
        $region43: #{tpu_custom_call.1} parent=11 // pred_region
          _
        $region44: #{tpu_custom_call.1} parent=11 // pred_fallthru
          _
      $region12: #{tpu_custom_call.1} parent=5 // pred_fallthru
        _
      %p363 = scmp.lt.s32.totalorder %s26, 3
      // Predicated region
      $region45: #{tpu_custom_call.1} parent=5 // pred_check
        %p364 = pneg %p363
      $region46: #{tpu_custom_call.1} parent=5 // pred_check_branch
        %366 = sbr.rel (%p364) target = $region48
      $region47: #{tpu_custom_call.1} parent=5 // pred_region
        // Predicated region
        $region49: #{tpu_custom_call.1} parent=47 // pred_check
          %p367 = pneg %p46
        $region50: #{tpu_custom_call.1} parent=47 // pred_check_branch
          %369 = sbr.rel (%p367) target = $region52
        $region51: #{tpu_custom_call.1} parent=47 // pred_region
          %s370 = sand.u32 %s36, 1
          %s371 = scalar_lea.sflag [#allocation4], %s370
          %s372 = sand.u32 %s36, 1
          %s373 = smul.addr %s372, 8
          %s374 = scalar_lea.vmem [#allocation3], %s373
          %s376 = ssub.s32 128, 128
          %377 = vsyncadd %s371, %s376
          %s378 = smul.addr %s26, 4
          %s379 = smul.addr %s378, 128
          %s380 = scalar_lea.hbm %s0, %s379
          %s382 = sshll.u32 %s374, 4
          %s383 = int_to_ptr.vmem [resolvable:$true] %s382
          %385 = dma.hbm_to_vmem [thread:$0]  %s380, 128, %s383, %s371
        $region52: #{tpu_custom_call.1} parent=47 // pred_fallthru
          _
        // Predicated region
        $region53: #{tpu_custom_call.1} parent=47 // pred_check
          %p386 = pneg %p72
        $region54: #{tpu_custom_call.1} parent=47 // pred_check_branch
          %388 = sbr.rel (%p386) target = $region56
        $region55: #{tpu_custom_call.1} parent=47 // pred_region
          %p389 = scmp.lt.s32.totalorder %s26, 2
          %s390 = scalar_select %p389, %s26, 2
          %s391 = smul.addr %s390, 8
          %s392 = scalar_lea.vmem %s1, %s391
        $region56: #{tpu_custom_call.1} parent=47 // pred_fallthru
          _
        // Predicated region
        $region57: #{tpu_custom_call.1} parent=47 // pred_check
          %p393 = pneg %p98
        $region58: #{tpu_custom_call.1} parent=47 // pred_check_branch
          %395 = sbr.rel (%p393) target = $region60
        $region59: #{tpu_custom_call.1} parent=47 // pred_region
          %p396 = scmp.lt.s32.totalorder %s26, 2
          %s397 = scalar_select %p396, %s26, 2
          %s398 = smul.addr %s397, 8
          %s399 = scalar_lea.vmem %s2, %s398
        $region60: #{tpu_custom_call.1} parent=47 // pred_fallthru
          _
      $region48: #{tpu_custom_call.1} parent=5 // pred_fallthru
        _
      %p400 = scmp.le.s32.totalorder 1, %s26
      %p401 = scmp.lt.s32.totalorder %s26, 4
      %p402 = pnand %p400, %p401
      %p403 = pneg %p402
      // Predicated region
      $region61: #{tpu_custom_call.1} parent=5 // pred_check
        _
      $region62: #{tpu_custom_call.1} parent=5 // pred_check_branch
        %405 = sbr.rel (%p402) target = $region64
      $region63: #{tpu_custom_call.1} parent=5 // pred_region
        %s406 = ssub.s32 %s26, 1
        %s407 = sand.u32 %s39, 1
        %s408 = scalar_lea.sflag [#allocation4], %s407
        %s409 = sand.u32 %s39, 1
        %s410 = smul.addr %s409, 8
        %s411 = scalar_lea.vmem [#allocation3], %s410
        // Predicated region
        $region65: #{tpu_custom_call.1} parent=63 // pred_check
          %p412 = pneg %p52
        $region66: #{tpu_custom_call.1} parent=63 // pred_check_branch
          %414 = sbr.rel (%p412) target = $region68
        $region67: #{tpu_custom_call.1} parent=63 // pred_region
          %415 = dma.done %s408, 128
        $region68: #{tpu_custom_call.1} parent=63 // pred_fallthru
          _
        %s416 = sand.u32 %s39, 1
        %s417 = scalar_lea.sflag [#allocation4], %s416
        %s418 = sand.u32 %s39, 1
        %s419 = smul.addr %s418, 8
        %s420 = scalar_lea.vmem [#allocation3], %s419
        %p421 = pneg %p52
        %p422 = pneg %p49
        %p423 = scmp.lt.s32.totalorder %s31, 2
        %s424 = scalar_select %p423, %s31, 2
        %s425 = smul.addr %s424, 8
        %s426 = scalar_lea.vmem %s1, %s425
        %p427 = pneg %p78
        %p428 = pneg %p75
        %p429 = scmp.lt.s32.totalorder %s31, 2
        %s430 = scalar_select %p429, %s31, 2
        %s431 = smul.addr %s430, 8
        %s432 = scalar_lea.vmem %s2, %s431
        %p433 = pneg %p104
        %p434 = pneg %p101
        %p435 = pneg %p125
        %p436 = pneg %p122
        %p437 = pneg %p146
        %p438 = pneg %p143
        %p439 = pneg %p167
        %p440 = pneg %p164
        %p441 = pneg %p188
        %p442 = pneg %p185
        %p443 = pneg %p209
        %p444 = pneg %p206
        %p445 = pneg %p230
        %p446 = pneg %p227
        %p447 = pneg %p251
        %p448 = pneg %p248
        %p449 = pneg %p272
        %p450 = pneg %p269
        %p451 = pneg %p298
        %p452 = pneg %p295
        %p453 = scmp.lt.s32.totalorder %s31, 2
        %s454 = scalar_select %p453, %s31, 2
        %s455 = smul.addr %s454, 8
        %s456 = scalar_lea.vmem %s11, %s455
        %p457 = pneg %p324
        %p458 = pneg %p321
        %s459 = sand.u32 %s311, 1
        %s460 = scalar_lea.sflag [#allocation5], %s459
        %s461 = sand.u32 %s311, 1
        %s462 = smul.addr %s461, 8
        %s463 = scalar_lea.vmem [#allocation6], %s462
        %p464 = scmp.lt.s32.totalorder %s31, 2
        %s465 = scalar_select %p464, %s31, 2
        %s466 = smul.addr %s465, 8
        %s467 = scalar_lea.vmem %s1, %s466
        %p468 = scmp.lt.s32.totalorder %s31, 2
        %s469 = scalar_select %p468, %s31, 2
        %s470 = smul.addr %s469, 8
        %s471 = scalar_lea.vmem %s2, %s470
        %p472 = scmp.lt.s32.totalorder %s31, 2
        %s473 = scalar_select %p472, %s31, 2
        %s474 = smul.addr %s473, 8
        %s475 = scalar_lea.vmem %s11, %s474
        %v476 = vld [vmem:[%s411] sm:$0xff]
        %v477 = vld [vmem:[%s467] sm:$0xff]
        %478 = vadd.xlane.f32.xlu0 %v476
        %v479 = vpop.xlane.xlu0 %478
        %v480 = vrcp.pop 128.0
        %v481 = vmul.f32 %v479, %v480
        %v482 = vsub.f32 %v476, %v481
        %v483 = vmul.f32 %v482, %v482
        %484 = vadd.xlane.f32.xlu0 %v483
        %v485 = vpop.xlane.xlu0 %484
        %v486 = vmul.f32 %v485, %v480
        %v487 = vadd.f32 %v486, 1e-05
        %v488 = vrsqrt.pop %v487
        %v489 = vmul.f32 %v482, %v488
        %v490 = vld [vmem:[%s4] sm:$0x1]
        %v492 = vlaneseq
        %v493 = vshrl.u32 %v492, 7
        %v494 = vsub.s32 0, %v493
        %v495 = vrot.slane %v490, %v494
        %v497 = vmul.f32 %v489, %v495
        %v498 = vld [vmem:[%s5] sm:$0x1]
        %v500 = vlaneseq
        %v501 = vshrl.u32 %v500, 7
        %v502 = vsub.s32 0, %v501
        %v503 = vrot.slane %v498, %v502
        %v505 = vadd.f32 %v497, %v503
        %v506 = vld [vmem:[%s6] sm:$0x1]
        %508 = vset.pattern.permute.xlu0 0
        %509 = vperm.xlu0 %508, %v477
        %v510 = vpop.permute.xlu0 %509
        %v513 = vlaneseq
        %v514 = vshrl.u32 %v513, 7
        %v515 = vsub.s32 0, %v514
        %v516 = vrot.slane %v506, %v515
        %v518 = vmul.f32 %v510, %v516
        %v519 = vld [vmem:[%s7] sm:$0x1]
        %v521 = vlaneseq
        %v522 = vshrl.u32 %v521, 7
        %v523 = vsub.s32 0, %v522
        %v524 = vrot.slane %v519, %v523
        %v526 = vadd.f32 %v518, %v524
        %v527 = vxor.u32 %v526, 2147483648
        %v528 = vmul.f32 %v527, 1.442695
        %v529 = vpow.pop %v528
        %v530 = vadd.f32 %v529, 1.0
        %v531 = vrcp.pop %v530
        %v532 = vmul.f32 1.0, %v531
        %v533 = vmul.f32 %v505, %v532
        %v534 = vlaneseq
        %v535 = vand.u32 %v534, 127
        %v536 = vld [vmem:[%s9] sm:$0x1]
        %v538 = vlaneseq
        %v539 = vshrl.u32 %v538, 7
        %v540 = vsub.s32 0, %v539
        %v541 = vrot.slane %v536, %v540
        %v543 = vadd.f32 %v541, 0.0
        %v544 = vld [vmem:[%s8] sm:$0x1]
        %v545 = vlaneseq
        %v546 = vshrl.u32 %v545, 7
        %v547 = vsub.s32 0, %v546
        %v548 = vrot.slane %v544, %v547
        %v549 = vmul.f32 %v533, %v548
        %550 = vadd.xlane.f32.xlu0 %v549
        %v551 = vpop.xlane.xlu0 %550
        %vm552 = vcmp.eq.s32.totalorder %v535, 0
        %v553 = vsel %vm552, %v551, 0.0
        %v554 = vadd.f32 %v543, %v553
        %v555 = vld [vmem:[%s8 + $0x1] sm:$0x1]
        %v556 = vlaneseq
        %v557 = vshrl.u32 %v556, 7
        %v558 = vsub.s32 0, %v557
        %v559 = vrot.slane %v555, %v558
        %v560 = vmul.f32 %v533, %v559
        %561 = vadd.xlane.f32.xlu0 %v560
        %v562 = vpop.xlane.xlu0 %561
        %vm563 = vcmp.eq.s32.totalorder %v535, 1
        %v564 = vsel %vm563, %v562, 0.0
        %v565 = vadd.f32 %v554, %v564
        %v566 = vld [vmem:[%s8 + $0x2] sm:$0x1]
        %v567 = vlaneseq
        %v568 = vshrl.u32 %v567, 7
        %v569 = vsub.s32 0, %v568
        %v570 = vrot.slane %v566, %v569
        %v571 = vmul.f32 %v533, %v570
        %572 = vadd.xlane.f32.xlu0 %v571
        %v573 = vpop.xlane.xlu0 %572
        %vm574 = vcmp.eq.s32.totalorder %v535, 2
        %v575 = vsel %vm574, %v573, 0.0
        %v576 = vadd.f32 %v565, %v575
        %vm577 = vcmask 23552
        %v578 = vsel %vm577, %v576, -inf
        %579 = vmax.xlane.f32.xlu0 %v578
        %v580 = vpop.xlane.xlu0 %579
        %v581 = vsub.f32 %v576, %v580
        %v582 = vmul.f32 %v581, 1.442695
        %v583 = vpow.pop %v582
        %v584 = vsel %vm577, %v583, 0.0
        %585 = vadd.xlane.f32.xlu0 %v584
        %v586 = vpop.xlane.xlu0 %585
        %v587 = vrcp.pop %v586
        %v588 = vmul.f32 %v583, %v587
        %589 = vst.msk [vmem:[%s475] sm:$0xff] %vm577, %v588
        %v590 = vsel %vm577, %v588, -inf
        %591 = vmax.xlane.f32.xlu0 %v590
        %v592 = vpop.xlane.xlu0 %591
        %v593 = vsub.f32 %v588, %v592
        %v594 = vmul.f32 %v593, 1.442695
        %v595 = vpow.pop %v594
        %v596 = vsel %vm577, %v595, 0.0
        %597 = vadd.xlane.f32.xlu0 %v596
        %v598 = vpop.xlane.xlu0 %597
        %v599 = vlog2.pop %v598
        %v600 = vmul.f32 %v599, 0.6931472
        %v601 = vadd.f32 %v600, %v592
        %v602 = vsub.f32 %v588, %v601
        %v603 = vld [vmem:[%s471] sm:$0xff]
        %604 = vset.pattern.permute.xlu0 0
        %605 = vperm.xlu0 %604, %v603
        %v606 = vpop.permute.xlu0 %605
        %vm607 = vcmp.eq.s32.totalorder %v535, %v606
        %v608 = vsel %vm607, 1, 0
        %v609 = vcvt.s32.f32 %v608
        %v610 = vmul.f32 %v602, %v609
        %v611 = vsel %vm577, %v610, 0.0
        %612 = vadd.xlane.f32.xlu0 %v611
        %v613 = vpop.xlane.xlu0 %612
        %v614 = vld [vmem:[%s10] sm:$0x1]
        %v616 = vlaneseq
        %v617 = vshrl.u32 %v616, 7
        %v618 = vsub.s32 0, %v617
        %v619 = vrot.slane %v614, %v618
        %v621 = vmul.f32 %v619, %v609
        %v622 = vsel %vm577, %v621, 0.0
        %623 = vadd.xlane.f32.xlu0 %v622
        %v624 = vpop.xlane.xlu0 %623
        %v625 = vsub.f32 0.0, %v624
        %v626 = vmul.f32 %v625, %v613
        %s627 = sld [smem:[#allocation2]]
        %v628 = vstv %s627
        %vm629 = vcmp.ge.f32.partialorder %v477, %v628
        %vm630 = vcmp.ge.f32.partialorder %v588, %v592
        %vm631 = vmand %vm629, %vm630
        %v632 = vsel %vm631, 1, 0
        %v633 = vcvt.s32.f32 %v632
        %v634 = vlaneseq
        %v635 = vshrl.u32 %v634, 7
        %s636 = smul.u32 %s31, 8
        %v637 = vstv %s636
        %v638 = vadd.s32 %v635, %v637
        %vm639 = vcmp.lt.s32.totalorder %v638, 20
        %v640 = vsel %vm639, %v626, 0.0
        %v641 = vsel %vm639, %v633, 0.0
        %v642 = vrot.slane %v640, 4
        %v643 = vadd.f32 %v640, %v642
        %v644 = vrot.slane %v643, 2
        %v645 = vadd.f32 %v643, %v644
        %v646 = vrot.slane %v645, 1
        %v647 = vadd.f32 %v645, %v646
        %vm648 = vcmask 7168
        %v649 = vsel %vm648, %v641, 0.0
        %v650 = vrot.slane %v649, 4
        %v651 = vadd.f32 %v649, %v650
        %v652 = vrot.slane %v651, 2
        %v653 = vadd.f32 %v651, %v652
        %v654 = vrot.slane %v653, 1
        %v655 = vadd.f32 %v653, %v654
        %657 = vset.pattern.permute.xlu0 0
        %658 = vperm.xlu0 %657, %v655
        %v659 = vpop.permute.xlu0 %658
        %v661 = vsel %vm563, %v659, 0.0
        %v662 = vsel %vm552, %v647, %v661
        %663 = vst [vmem:[%s463] sm:$0xff] %v662
        %p664 = scmp.lt.s32.totalorder %s31, 2
        %s665 = scalar_select %p664, %s31, 2
        %s666 = smul.addr %s665, 8
        %s667 = scalar_lea.vmem %s11, %s666
        %s668 = sand.u32 %s311, 1
        %s669 = scalar_lea.sflag [#allocation5], %s668
        %s670 = sand.u32 %s311, 1
        %s671 = smul.addr %s670, 8
        %s672 = scalar_lea.vmem [#allocation6], %s671
        // Predicated region
        $region69: #{tpu_custom_call.1} parent=63 // pred_check
          %p673 = pneg %p295
        $region70: #{tpu_custom_call.1} parent=63 // pred_check_branch
          %675 = sbr.rel (%p673) target = $region72
        $region71: #{tpu_custom_call.1} parent=63 // pred_region
          _
        $region72: #{tpu_custom_call.1} parent=63 // pred_fallthru
          _
        // Predicated region
        $region73: #{tpu_custom_call.1} parent=63 // pred_check
          %p676 = pneg %p321
        $region74: #{tpu_custom_call.1} parent=63 // pred_check_branch
          %678 = sbr.rel (%p676) target = $region76
        $region75: #{tpu_custom_call.1} parent=63 // pred_region
          %s680 = ssub.s32 128, 128
          %681 = vsyncadd %s669, %s680
          %s682 = smul.addr %s31, 128
          %s683 = scalar_lea.hbm %s12, %s682
          %s685 = sshll.u32 %s672, 4
          %s686 = int_to_ptr.vmem [resolvable:$true] %s685
          %688 = dma.vmem_to_hbm [thread:$0]  %s686, 128, %s683, %s669
        $region76: #{tpu_custom_call.1} parent=63 // pred_fallthru
          _
      $region64: #{tpu_custom_call.1} parent=5 // pred_fallthru
        _
      %p689 = scmp.le.s32.totalorder 2, %s26
      // Predicated region
      $region77: #{tpu_custom_call.1} parent=5 // pred_check
        %p690 = pneg %p689
      $region78: #{tpu_custom_call.1} parent=5 // pred_check_branch
        %692 = sbr.rel (%p690) target = $region80
      $region79: #{tpu_custom_call.1} parent=5 // pred_region
        %s693 = ssub.s32 %s26, 2
        // Predicated region
        $region81: #{tpu_custom_call.1} parent=79 // pred_check
          %p694 = pneg %p301
        $region82: #{tpu_custom_call.1} parent=79 // pred_check_branch
          %696 = sbr.rel (%p694) target = $region84
        $region83: #{tpu_custom_call.1} parent=79 // pred_region
          %p697 = scmp.lt.s32.totalorder %s32, 2
          %s698 = scalar_select %p697, %s32, 2
          %s699 = smul.addr %s698, 8
          %s700 = scalar_lea.vmem %s11, %s699
        $region84: #{tpu_custom_call.1} parent=79 // pred_fallthru
          _
        // Predicated region
        $region85: #{tpu_custom_call.1} parent=79 // pred_check
          %p701 = pneg %p327
        $region86: #{tpu_custom_call.1} parent=79 // pred_check_branch
          %703 = sbr.rel (%p701) target = $region88
        $region87: #{tpu_custom_call.1} parent=79 // pred_region
          %s704 = sand.u32 %s312, 1
          %s705 = scalar_lea.sflag [#allocation5], %s704
          %s706 = sand.u32 %s312, 1
          %s707 = smul.addr %s706, 8
          %s708 = scalar_lea.vmem [#allocation6], %s707
          %709 = dma.done %s705, 128
        $region88: #{tpu_custom_call.1} parent=79 // pred_fallthru
          _
      $region80: #{tpu_custom_call.1} parent=5 // pred_fallthru
        _
    $region6: #{tpu_custom_call.1} parent=1 // loop_footer
      %s30 = sadd.s32 1, %s26
    $region7: #{tpu_custom_call.1} parent=1 // loop_footer_branch
      %25 = sbr.rel target = $region3
    $region8: #{tpu_custom_call.1} parent=1 // loop_exit
      _
    %710 = vsyncpa [#allocation4], 1
    %s711 = scalar_lea.sflag [#allocation4], 1
    %712 = vsyncpa %s711, 1
    %713 = vsyncpa [#allocation5], 1
    %s714 = scalar_lea.sflag [#allocation5], 1
    %715 = vsyncpa %s714, 1

</llo_original>
